<compile_context>
chip_gen: v7x
topology: tpu7x:2x2x1
jax: 0.10.0
libtpu: 0.0.40
codegen_flags: <defaults>
</compile_context>

<pallas_src>
import math

import jax
import jax.numpy as jnp
from jax.experimental import pallas as pl
from jax.experimental.pallas import tpu as pltpu


def _round_up(x, m):
    return ((x + m - 1) // m) * m


def select_compute_dtype():
    """bf16 on v6e/v7x (native bf16 MXU/VPU), f32 on v5e and older."""
    try:
        kind = jax.devices()[0].device_kind.lower()
    except Exception:
        return jnp.float32
    if "v6" in kind or "v7" in kind:
        return jnp.bfloat16
    return jnp.float32


def critic_kernel(x_ref, w1_ref, w23_ref, w4_ref, b_ref, out_ref):
    """Fused 4-layer MLP forward for one [TM, in_dim] batch tile.

    Weights/biases are resident (constant index_map across the batch grid).
    All matmuls accumulate in f32; relu/bias-add happen on the f32 result and
    the activation is cast back to the compute dtype only for the next dot.
    """
    f32 = jnp.float32
    x = x_ref[...]                       # [TM, in_dim], compute dtype
    cd = x.dtype
    b = b_ref[...]                       # [4, hidden], f32

    h = jnp.dot(x, w1_ref[...], preferred_element_type=f32) + b[0:1, :]
    h = jnp.maximum(h, 0.0).astype(cd)

    h = jnp.dot(h, w23_ref[0], preferred_element_type=f32) + b[1:2, :]
    h = jnp.maximum(h, 0.0).astype(cd)

    h = jnp.dot(h, w23_ref[1], preferred_element_type=f32) + b[2:3, :]
    h = jnp.maximum(h, 0.0).astype(cd)

    v = jnp.dot(h, w4_ref[...], preferred_element_type=f32) + b[3:4, 0:1]
    out_ref[...] = v.astype(out_ref.dtype)


def pack_params(params, compute_dtype):
    """Pack 8 per-layer arrays into 4 kernel operands.

    Returns (w1 [in,h], w23 [2,h,h], w4 [h,1], b [4,h]) where b[3,0] holds the
    final layer's scalar bias (rest of row 3 is zero padding).
    """
    w1, b1, w2, b2, w3, b3, w4, b4 = params
    hidden = w2.shape[0]
    w23 = jnp.stack([w2, w3], axis=0).astype(compute_dtype)
    b_packed = jnp.zeros((4, hidden), jnp.float32)
    b_packed = b_packed.at[0].set(b1[0])
    b_packed = b_packed.at[1].set(b2[0])
    b_packed = b_packed.at[2].set(b3[0])
    b_packed = b_packed.at[3, 0].set(b4[0, 0])
    return (w1.astype(compute_dtype), w23, w4.astype(compute_dtype), b_packed)


def critic_forward(vals, params, *, compute_dtype=None, tm_max=1024):
    """vals: [B, obs_dim + z_dim] float32 -> value: [B, 1] float32."""
    if compute_dtype is None:
        compute_dtype = select_compute_dtype()
    w1, w23, w4, b = pack_params(params, compute_dtype)

    B, in_dim = vals.shape
    hidden = w23.shape[-1]

    # Batch tile: multiple of 8 sublanes, large enough to pipeline / fill MXU.
    tm_max = max(8, _round_up(tm_max, 8))
    tm = min(tm_max, _round_up(B, 8))
    Bp = _round_up(B, tm)

    x = vals.astype(compute_dtype)
    if Bp != B:
        x = jnp.pad(x, ((0, Bp - B), (0, 0)))

    grid = (Bp // tm,)

    out = pl.pallas_call(
        critic_kernel,
        out_shape=jax.ShapeDtypeStruct((Bp, 1), jnp.float32),
        grid=grid,
        in_specs=[
            # Batch-streamed activations: new block per grid step.
            pl.BlockSpec((tm, in_dim), lambda i: (i, 0)),
            # Weights / biases: constant block index -> resident in VMEM.
            pl.BlockSpec((in_dim, hidden), lambda i: (0, 0)),
            pl.BlockSpec((2, hidden, hidden), lambda i: (0, 0, 0)),
            pl.BlockSpec((hidden, 1), lambda i: (0, 0)),
            pl.BlockSpec((4, hidden), lambda i: (0, 0)),
        ],
        out_specs=pl.BlockSpec((tm, 1), lambda i: (i, 0)),
        compiler_params=pltpu.CompilerParams(
            dimension_semantics=("parallel",)),  # shards batch across v7x TCs
    )(x, w1, w23, w4, b)

    return out[:B]


def init_linear(key, fan_in, fan_out):
    """PyTorch nn.Linear default init: U(-1/sqrt(fan_in), 1/sqrt(fan_in)).

    Weight returned as [in, out] (transposed vs. torch's [out, in]).
    """
    kw, kb = jax.random.split(key)
    bound = 1.0 / math.sqrt(fan_in)
    w = jax.random.uniform(kw, (fan_in, fan_out), jnp.float32, -bound, bound)
    b = jax.random.uniform(kb, (1, fan_out), jnp.float32, -bound, bound)
    return w, b


def make_params(key, obs_dim, z_dim, hidden_dim):
    in_dim = obs_dim + z_dim
    k1, k2, k3, k4 = jax.random.split(key, 4)
    w1, b1 = init_linear(k1, in_dim, hidden_dim)
    w2, b2 = init_linear(k2, hidden_dim, hidden_dim)
    w3, b3 = init_linear(k3, hidden_dim, hidden_dim)
    w4, b4 = init_linear(k4, hidden_dim, 1)
    return (w1, b1, w2, b2, w3, b3, w4, b4)


def critic_ref(vals, params, compute_dtype):
    """Pure-JAX reference with the same dtype policy as the kernel."""
    w1, b1, w2, b2, w3, b3, w4, b4 = params
    cd = compute_dtype
    f32 = jnp.float32
    h = jnp.dot(vals.astype(cd), w1.astype(cd), preferred_element_type=f32) + b1
    h = jnp.maximum(h, 0.0).astype(cd)
    h = jnp.dot(h, w2.astype(cd), preferred_element_type=f32) + b2
    h = jnp.maximum(h, 0.0).astype(cd)
    h = jnp.dot(h, w3.astype(cd), preferred_element_type=f32) + b3
    h = jnp.maximum(h, 0.0).astype(cd)
    return jnp.dot(h, w4.astype(cd), preferred_element_type=f32) + b4


if __name__ == "__main__":
    obs_dim, z_dim, hidden_dim = 12, 4, 32
    compute_dtype = select_compute_dtype()

    key = jax.random.PRNGKey(0)
    k_params, k_in1, k_in2 = jax.random.split(key, 3)
    params = make_params(k_params, obs_dim, z_dim, hidden_dim)

    # --- small batch (single grid step, padded to 8 sublanes) ---
    batch = 8
    vals = jax.random.normal(k_in1, (batch, obs_dim + z_dim), jnp.float32)
    value = jax.block_until_ready(critic_forward(vals, params,
                                                 compute_dtype=compute_dtype))
    expected = critic_ref(vals, params, compute_dtype)
    assert value.shape == (batch, 1), value.shape
    assert jnp.allclose(value, expected, atol=1e-3, rtol=1e-3), (
        float(jnp.max(jnp.abs(value - expected))))

    # --- larger batch exercising the multi-tile grid + padding path ---
    batch2 = 600
    vals2 = jax.random.normal(k_in2, (batch2, obs_dim + z_dim), jnp.float32)
    value2 = jax.block_until_ready(critic_forward(vals2, params,
                                                  compute_dtype=compute_dtype,
                                                  tm_max=256))
    expected2 = critic_ref(vals2, params, compute_dtype)
    assert value2.shape == (batch2, 1), value2.shape
    assert jnp.allclose(value2, expected2, atol=1e-3, rtol=1e-3), (
        float(jnp.max(jnp.abs(value2 - expected2))))

    print("KERNEL_OK")
</pallas_src>

<mosaic_0001>
module attributes {stable_mosaic.version = 11 : i64} {
  func.func @critic_kernel(%arg0: i32, %arg1: memref<8x16xf32, #tpu.memory_space<vmem>>, %arg2: memref<16x32xf32, #tpu.memory_space<vmem>>, %arg3: memref<2x32x32xf32, #tpu.memory_space<vmem>>, %arg4: memref<32x1xf32, #tpu.memory_space<vmem>>, %arg5: memref<4x32xf32, #tpu.memory_space<vmem>>, %arg6: memref<8x1xf32, #tpu.memory_space<vmem>>) attributes {dimension_semantics = [#tpu.dimension_semantics<parallel>], iteration_bounds = array<i64: 1>, scalar_prefetch = 0 : i64, scratch_operands = 0 : i64, tpu.core_type = #tpu.core_type<tc>, window_params = [{transform_indices = @transform_0, window_bounds = array<i64: 8, 16>}, {pipeline_mode = #tpu.pipeline_mode<synchronous>, transform_indices = @transform_1, window_bounds = array<i64: 16, 32>}, {pipeline_mode = #tpu.pipeline_mode<synchronous>, transform_indices = @transform_2, window_bounds = array<i64: 2, 32, 32>}, {pipeline_mode = #tpu.pipeline_mode<synchronous>, transform_indices = @transform_3, window_bounds = array<i64: 32, 1>}, {pipeline_mode = #tpu.pipeline_mode<synchronous>, transform_indices = @transform_4, window_bounds = array<i64: 4, 32>}, {transform_indices = @transform_5, window_bounds = array<i64: 8, 1>}]} {
    %c0 = arith.constant 0 : index
    %c0_0 = arith.constant 0 : index
    %0 = vector.load %arg1[%c0, %c0_0] : memref<8x16xf32, #tpu.memory_space<vmem>>, vector<8x16xf32>
    %c0_1 = arith.constant 0 : index
    %c0_2 = arith.constant 0 : index
    %1 = vector.load %arg5[%c0_1, %c0_2] : memref<4x32xf32, #tpu.memory_space<vmem>>, vector<4x32xf32>
    %c0_3 = arith.constant 0 : index
    %c0_4 = arith.constant 0 : index
    %2 = vector.load %arg2[%c0_3, %c0_4] : memref<16x32xf32, #tpu.memory_space<vmem>>, vector<16x32xf32>
    %cst = arith.constant dense<0.000000e+00> : vector<8x32xf32>
    %3 = tpu.matmul %0, %2, %cst {dimension_numbers = #tpu.dot_dimension_numbers<[1], [0], [0], [1], [0, 0, 1, 1], [], []>} : vector<8x16xf32>, vector<16x32xf32>, vector<8x32xf32> -> vector<8x32xf32>
    %4 = vector.extract_strided_slice %1 {offsets = [0, 0], sizes = [1, 32], strides = [1, 1]} : vector<4x32xf32> to vector<1x32xf32>
    %5 = vector.broadcast %4 : vector<1x32xf32> to vector<8x32xf32>
    %6 = arith.addf %3, %5 : vector<8x32xf32>
    %cst_5 = arith.constant 0.000000e+00 : f32
    %7 = vector.broadcast %cst_5 : f32 to vector<8x32xf32>
    %8 = arith.maximumf %6, %7 : vector<8x32xf32>
    %c0_6 = arith.constant 0 : index
    %c0_7 = arith.constant 0 : index
    %c0_8 = arith.constant 0 : index
    %9 = vector.load %arg3[%c0_6, %c0_7, %c0_8] : memref<2x32x32xf32, #tpu.memory_space<vmem>>, vector<1x32x32xf32>
    %10 = vector.shape_cast %9 : vector<1x32x32xf32> to vector<32x32xf32>
    %cst_9 = arith.constant dense<0.000000e+00> : vector<8x32xf32>
    %11 = tpu.matmul %8, %10, %cst_9 {dimension_numbers = #tpu.dot_dimension_numbers<[1], [0], [0], [1], [0, 0, 1, 1], [], []>} : vector<8x32xf32>, vector<32x32xf32>, vector<8x32xf32> -> vector<8x32xf32>
    %12 = vector.extract_strided_slice %1 {offsets = [1, 0], sizes = [1, 32], strides = [1, 1]} : vector<4x32xf32> to vector<1x32xf32>
    %13 = vector.broadcast %12 : vector<1x32xf32> to vector<8x32xf32>
    %14 = arith.addf %11, %13 : vector<8x32xf32>
    %cst_10 = arith.constant 0.000000e+00 : f32
    %15 = vector.broadcast %cst_10 : f32 to vector<8x32xf32>
    %16 = arith.maximumf %14, %15 : vector<8x32xf32>
    %c1 = arith.constant 1 : index
    %c0_11 = arith.constant 0 : index
    %c0_12 = arith.constant 0 : index
    %17 = vector.load %arg3[%c1, %c0_11, %c0_12] : memref<2x32x32xf32, #tpu.memory_space<vmem>>, vector<1x32x32xf32>
    %18 = vector.shape_cast %17 : vector<1x32x32xf32> to vector<32x32xf32>
    %cst_13 = arith.constant dense<0.000000e+00> : vector<8x32xf32>
    %19 = tpu.matmul %16, %18, %cst_13 {dimension_numbers = #tpu.dot_dimension_numbers<[1], [0], [0], [1], [0, 0, 1, 1], [], []>} : vector<8x32xf32>, vector<32x32xf32>, vector<8x32xf32> -> vector<8x32xf32>
    %20 = vector.extract_strided_slice %1 {offsets = [2, 0], sizes = [1, 32], strides = [1, 1]} : vector<4x32xf32> to vector<1x32xf32>
    %21 = vector.broadcast %20 : vector<1x32xf32> to vector<8x32xf32>
    %22 = arith.addf %19, %21 : vector<8x32xf32>
    %cst_14 = arith.constant 0.000000e+00 : f32
    %23 = vector.broadcast %cst_14 : f32 to vector<8x32xf32>
    %24 = arith.maximumf %22, %23 : vector<8x32xf32>
    %c0_15 = arith.constant 0 : index
    %c0_16 = arith.constant 0 : index
    %25 = vector.load %arg4[%c0_15, %c0_16] : memref<32x1xf32, #tpu.memory_space<vmem>>, vector<32x1xf32>
    %cst_17 = arith.constant dense<0.000000e+00> : vector<8x1xf32>
    %26 = tpu.matmul %24, %25, %cst_17 {dimension_numbers = #tpu.dot_dimension_numbers<[1], [0], [0], [1], [0, 0, 1, 1], [], []>} : vector<8x32xf32>, vector<32x1xf32>, vector<8x1xf32> -> vector<8x1xf32>
    %27 = vector.extract_strided_slice %1 {offsets = [3, 0], sizes = [1, 1], strides = [1, 1]} : vector<4x32xf32> to vector<1x1xf32>
    %28 = vector.broadcast %27 : vector<1x1xf32> to vector<8x1xf32>
    %29 = arith.addf %26, %28 : vector<8x1xf32>
    %c0_18 = arith.constant 0 : index
    %c0_19 = arith.constant 0 : index
    %30 = vector.load %arg6[%c0_18, %c0_19] : memref<8x1xf32, #tpu.memory_space<vmem>>, vector<8x1xf32>
    tpu.vector_store %arg6[%c0_18, %c0_19], %29 {strides = array<i32>} : memref<8x1xf32, #tpu.memory_space<vmem>>, vector<8x1xf32>,
    return
  }
  func.func @transform_0(%arg0: i32) -> (i32, i32) {
    %c0_i32 = arith.constant 0 : i32
    %c0_i32_0 = arith.constant 0 : i32
    return %arg0, %c0_i32 : i32, i32
  }
  func.func @transform_1(%arg0: i32) -> (i32, i32) {
    %c0_i32 = arith.constant 0 : i32
    %c0_i32_0 = arith.constant 0 : i32
    %c0_i32_1 = arith.constant 0 : i32
    return %c0_i32, %c0_i32_0 : i32, i32
  }
  func.func @transform_2(%arg0: i32) -> (i32, i32, i32) {
    %c0_i32 = arith.constant 0 : i32
    %c0_i32_0 = arith.constant 0 : i32
    %c0_i32_1 = arith.constant 0 : i32
    %c0_i32_2 = arith.constant 0 : i32
    return %c0_i32, %c0_i32_0, %c0_i32_1 : i32, i32, i32
  }
  func.func @transform_3(%arg0: i32) -> (i32, i32) {
    %c0_i32 = arith.constant 0 : i32
    %c0_i32_0 = arith.constant 0 : i32
    %c0_i32_1 = arith.constant 0 : i32
    return %c0_i32, %c0_i32_0 : i32, i32
  }
  func.func @transform_4(%arg0: i32) -> (i32, i32) {
    %c0_i32 = arith.constant 0 : i32
    %c0_i32_0 = arith.constant 0 : i32
    %c0_i32_1 = arith.constant 0 : i32
    return %c0_i32, %c0_i32_0 : i32, i32
  }
  func.func @transform_5(%arg0: i32) -> (i32, i32) {
    %c0_i32 = arith.constant 0 : i32
    %c0_i32_0 = arith.constant 0 : i32
    return %arg0, %c0_i32 : i32, i32
  }
}

</mosaic_0001>

<llo_original>
// kernel: tpu_custom_call.1
$region0: #{tpu_custom_call.1}
  #allocation0 [shape = 'u32[]', space=smem, size = 0x4, offset = 0x4, fixed_abs, tag = 'smem constant byte address 0x4 - core index']
  #allocation1 [shape = 'u32[144,128]{1,0:T(1,128)}', space=vmem, size = 0x12000, scoped, tag = 'internal scratch']
  %s0 = inlined_call_operand.vmem [shape: f32[8,16], index: 0, kind: input, shape index: {}]
  %s1 = inlined_call_operand.vmem [shape: f32[16,32], index: 1, kind: input, shape index: {}]
  %s2 = inlined_call_operand.hbm [shape: f32[2,32,32], index: 2, kind: input, shape index: {}]
  %s3 = inlined_call_operand.vmem [shape: f32[32,1], index: 3, kind: input, shape index: {}]
  %s4 = inlined_call_operand.vmem [shape: f32[4,32], index: 4, kind: input, shape index: {}]
  %s5 = inlined_call_operand.vmem [shape: f32[8,1], index: 5, kind: output, shape index: {}]
  %s6 = sld [smem:[#allocation0]]
  $region34: #{tpu_custom_call.1} parent=0
    _
  %s8 = ssub.s32 1, %s6
  %s9 = scalar_select 0, %s8, %s6
  $region1: #{tpu_custom_call.1} parent=0
    #allocation2 [shape = 'u8[32768]{0}', space=vmem, size = 0x8000, scoped, tag = 'input window, operand 2, single buffered']
    #allocation3 [shape = 's32[1]{0}', space=sflag, size = 0x4, scoped, tag = 'scoped memory for tpu_custom_call.1']
    %10 = vsyncpa [#allocation3], 0
    // Predicated region
    $region2: #{tpu_custom_call.1} parent=1 // pred_check
      _
    $region3: #{tpu_custom_call.1} parent=1 // pred_check_branch
      %12 = sbr.rel (0) target = $region5
    $region4: #{tpu_custom_call.1} parent=1 // pred_region
      _
    $region5: #{tpu_custom_call.1} parent=1 // pred_fallthru
      _
    // Predicated region
    $region6: #{tpu_custom_call.1} parent=1 // pred_check
      _
    $region7: #{tpu_custom_call.1} parent=1 // pred_check_branch
      %14 = sbr.rel (0) target = $region9
    $region8: #{tpu_custom_call.1} parent=1 // pred_region
      _
    $region9: #{tpu_custom_call.1} parent=1 // pred_fallthru
      _
    // Predicated region
    $region10: #{tpu_custom_call.1} parent=1 // pred_check
      _
    $region11: #{tpu_custom_call.1} parent=1 // pred_check_branch
      %16 = sbr.rel (0) target = $region13
    $region12: #{tpu_custom_call.1} parent=1 // pred_region
      %s18 = ssub.s32 1024, 1024
      %19 = vsyncadd [#allocation3], %s18
      %s20 = sshll.u32 [#allocation2], 4
      %s21 = int_to_ptr.vmem [resolvable:$true] %s20
      %26 = dma.hbm_to_vmem [thread:$0]  %s2, 1024, %s21, [#allocation3], 128, 128, 8
    $region13: #{tpu_custom_call.1} parent=1 // pred_fallthru
      _
    // Predicated region
    $region14: #{tpu_custom_call.1} parent=1 // pred_check
      _
    $region15: #{tpu_custom_call.1} parent=1 // pred_check_branch
      %28 = sbr.rel (0) target = $region17
    $region16: #{tpu_custom_call.1} parent=1 // pred_region
      _
    $region17: #{tpu_custom_call.1} parent=1 // pred_fallthru
      _
    // Predicated region
    $region18: #{tpu_custom_call.1} parent=1 // pred_check
      _
    $region19: #{tpu_custom_call.1} parent=1 // pred_check_branch
      %30 = sbr.rel (0) target = $region21
    $region20: #{tpu_custom_call.1} parent=1 // pred_region
      _
    $region21: #{tpu_custom_call.1} parent=1 // pred_fallthru
      _
    // Predicated region
    $region22: #{tpu_custom_call.1} parent=1 // pred_check
      _
    $region23: #{tpu_custom_call.1} parent=1 // pred_check_branch
      %32 = sbr.rel (0) target = $region25
    $region24: #{tpu_custom_call.1} parent=1 // pred_region
      %33 = dma.done [#allocation3], 1024
    $region25: #{tpu_custom_call.1} parent=1 // pred_fallthru
      _
    %v34 = vld [vmem:[%s0] sm:$0xff]
    %v35 = vld [vmem:[%s4] sm:$0xf]
    %v36 = vld [vmem:[%s1] sm:$0xff]
    %v37 = vld [vmem:[%s1 + $0x8] sm:$0xff]
    %v38 = vlaneseq
    %v39 = vshrl.u32 %v38, 7
    %v40 = vsub.s32 0, %v39
    %v41 = vrot.slane %v35, %v40
    %vm42 = vcmask 130048
    %v44 = vsel %vm42, %v34, 0
    %46 = vmatprep.subr.mxu0 0.0
    %47 = vmatpush1.msra.mxu0 %v36
    %48 = vmatprep.subr.mxu0 0.0
    %49 = vmatpush1.msra.mxu0 %v37
    %50 = vmatprep.subr.mxu0 0.0
    %51 = vmatpush1.msra.mxu0 0.0
    %52 = vmatprep.subr.mxu0 0.0
    %53 = vmatpush1.msra.mxu0 0.0
    %54 = vmatprep.subr.mxu0 0.0
    %55 = vmatpush1.msra.mxu0 0.0
    %56 = vmatprep.subr.mxu0 0.0
    %57 = vmatpush1.msra.mxu0 0.0
    %58 = vmatprep.subr.mxu0 0.0
    %59 = vmatpush1.msra.mxu0 0.0
    %60 = vmatprep.subr.mxu0 0.0
    %61 = vmatpush1.msra.mxu0 0.0
    %62 = vmatprep.subr.mxu0 0.0
    %63 = vmatpush1.msra.mxu0 0.0
    %64 = vmatprep.subr.mxu0 0.0
    %65 = vmatpush1.msra.mxu0 0.0
    %66 = vmatprep.subr.mxu0 0.0
    %67 = vmatpush1.msra.mxu0 0.0
    %68 = vmatprep.subr.mxu0 0.0
    %69 = vmatpush1.msra.mxu0 0.0
    %70 = vmatprep.subr.mxu0 0.0
    %71 = vmatpush1.msra.mxu0 0.0
    %72 = vmatprep.subr.mxu0 0.0
    %73 = vmatpush1.msra.mxu0 0.0
    %74 = vmatprep.subr.mxu0 0.0
    %75 = vmatpush1.msra.mxu0 0.0
    %76 = vmatprep.subr.mxu0 0.0
    %77 = vmatpush1.msra.mxu0 0.0
    %78 = vmatprep.subr.mxu0 0.0
    %79 = vmatpush1.msra.mxu0 0.0
    %80 = vmatprep.subr.mxu0 0.0
    %81 = vmatpush1.msra.mxu0 0.0
    %82 = vmatprep.subr.mxu0 0.0
    %83 = vmatpush1.msra.mxu0 0.0
    %84 = vmatprep.subr.mxu0 0.0
    %85 = vmatpush1.msra.mxu0 0.0
    %86 = vmatprep.subr.mxu0 0.0
    %87 = vmatpush1.msra.mxu0 0.0
    %88 = vmatprep.subr.mxu0 0.0
    %89 = vmatpush1.msra.mxu0 0.0
    %90 = vmatprep.subr.mxu0 0.0
    %91 = vmatpush1.msra.mxu0 0.0
    %92 = vmatprep.subr.mxu0 0.0
    %93 = vmatpush1.msra.mxu0 0.0
    %94 = vmatprep.subr.mxu0 0.0
    %95 = vmatpush1.msra.mxu0 0.0
    %96 = vmatprep.subr.mxu0 0.0
    %97 = vmatpush1.msra.mxu0 0.0
    %98 = vmatprep.subr.mxu0 0.0
    %99 = vmatpush1.msra.mxu0 0.0
    %100 = vmatprep.subr.mxu0 0.0
    %101 = vmatpush1.msra.mxu0 0.0
    %102 = vmatprep.subr.mxu0 0.0
    %103 = vmatpush1.msra.mxu0 0.0
    %104 = vmatprep.subr.mxu0 0.0
    %105 = vmatpush1.msra.mxu0 0.0
    %106 = vmatprep.subr.mxu0 0.0
    %107 = vmatpush1.msra.mxu0 0.0
    %108 = vmatprep.subr.mxu0 0.0
    %109 = vmatpush1.msra.mxu0 0.0
    %110 = vmatprep.mubr.f32.mxu0 0.0
    %111 = vmatmul.mubr.f32.gmra.mrb[0].mxu0 %v44
    %v112 = vpop.f32.mrb[0].mxu0
    %v113 = vadd.f32 %v41, %v112
    %v114 = vpop.f32.mrb[0].mxu0
    %115 = vdwg.mxu0
    %v116 = vmax.f32 %v113, 0.0
    %v117 = vld [vmem:[#allocation2] sm:$0xff]
    %v118 = vld [vmem:[#allocation2 + $0x8] sm:$0xff]
    %v119 = vld [vmem:[#allocation2 + $0x10] sm:$0xff]
    %v120 = vld [vmem:[#allocation2 + $0x18] sm:$0xff]
    %v121 = vlaneseq
    %v122 = vshrl.u32 %v121, 7
    %v123 = vsub.s32 1, %v122
    %v124 = vrot.slane %v35, %v123
    %vm125 = vcmask 261120
    %v127 = vsel %vm125, %v116, 0
    %129 = vmatprep.subr.mxu0 0.0
    %130 = vmatpush1.msra.mxu0 %v117
    %131 = vmatprep.subr.mxu0 0.0
    %132 = vmatpush1.msra.mxu0 %v118
    %133 = vmatprep.subr.mxu0 0.0
    %134 = vmatpush1.msra.mxu0 %v119
    %135 = vmatprep.subr.mxu0 0.0
    %136 = vmatpush1.msra.mxu0 %v120
    %137 = vmatprep.subr.mxu0 0.0
    %138 = vmatpush1.msra.mxu0 0.0
    %139 = vmatprep.subr.mxu0 0.0
    %140 = vmatpush1.msra.mxu0 0.0
    %141 = vmatprep.subr.mxu0 0.0
    %142 = vmatpush1.msra.mxu0 0.0
    %143 = vmatprep.subr.mxu0 0.0
    %144 = vmatpush1.msra.mxu0 0.0
    %145 = vmatprep.subr.mxu0 0.0
    %146 = vmatpush1.msra.mxu0 0.0
    %147 = vmatprep.subr.mxu0 0.0
    %148 = vmatpush1.msra.mxu0 0.0
    %149 = vmatprep.subr.mxu0 0.0
    %150 = vmatpush1.msra.mxu0 0.0
    %151 = vmatprep.subr.mxu0 0.0
    %152 = vmatpush1.msra.mxu0 0.0
    %153 = vmatprep.subr.mxu0 0.0
    %154 = vmatpush1.msra.mxu0 0.0
    %155 = vmatprep.subr.mxu0 0.0
    %156 = vmatpush1.msra.mxu0 0.0
    %157 = vmatprep.subr.mxu0 0.0
    %158 = vmatpush1.msra.mxu0 0.0
    %159 = vmatprep.subr.mxu0 0.0
    %160 = vmatpush1.msra.mxu0 0.0
    %161 = vmatprep.subr.mxu0 0.0
    %162 = vmatpush1.msra.mxu0 0.0
    %163 = vmatprep.subr.mxu0 0.0
    %164 = vmatpush1.msra.mxu0 0.0
    %165 = vmatprep.subr.mxu0 0.0
    %166 = vmatpush1.msra.mxu0 0.0
    %167 = vmatprep.subr.mxu0 0.0
    %168 = vmatpush1.msra.mxu0 0.0
    %169 = vmatprep.subr.mxu0 0.0
    %170 = vmatpush1.msra.mxu0 0.0
    %171 = vmatprep.subr.mxu0 0.0
    %172 = vmatpush1.msra.mxu0 0.0
    %173 = vmatprep.subr.mxu0 0.0
    %174 = vmatpush1.msra.mxu0 0.0
    %175 = vmatprep.subr.mxu0 0.0
    %176 = vmatpush1.msra.mxu0 0.0
    %177 = vmatprep.subr.mxu0 0.0
    %178 = vmatpush1.msra.mxu0 0.0
    %179 = vmatprep.subr.mxu0 0.0
    %180 = vmatpush1.msra.mxu0 0.0
    %181 = vmatprep.subr.mxu0 0.0
    %182 = vmatpush1.msra.mxu0 0.0
    %183 = vmatprep.subr.mxu0 0.0
    %184 = vmatpush1.msra.mxu0 0.0
    %185 = vmatprep.subr.mxu0 0.0
    %186 = vmatpush1.msra.mxu0 0.0
    %187 = vmatprep.subr.mxu0 0.0
    %188 = vmatpush1.msra.mxu0 0.0
    %189 = vmatprep.subr.mxu0 0.0
    %190 = vmatpush1.msra.mxu0 0.0
    %191 = vmatprep.subr.mxu0 0.0
    %192 = vmatpush1.msra.mxu0 0.0
    %193 = vmatprep.mubr.f32.mxu0 0.0
    %194 = vmatmul.mubr.f32.gmra.mrb[0].mxu0 %v127
    %v195 = vpop.f32.mrb[0].mxu0
    %v196 = vadd.f32 %v124, %v195
    %v197 = vpop.f32.mrb[0].mxu0
    %198 = vdwg.mxu0
    %v199 = vmax.f32 %v196, 0.0
    %s200 = scalar_lea.vmem [#allocation2], 32
    %v201 = vld [vmem:[%s200] sm:$0xff]
    %v202 = vld [vmem:[%s200 + $0x8] sm:$0xff]
    %v203 = vld [vmem:[%s200 + $0x10] sm:$0xff]
    %v204 = vld [vmem:[%s200 + $0x18] sm:$0xff]
    %v205 = vlaneseq
    %v206 = vshrl.u32 %v205, 7
    %v207 = vsub.s32 2, %v206
    %v208 = vrot.slane %v35, %v207
    %v210 = vsel %vm125, %v199, 0
    %212 = vmatprep.subr.mxu0 0.0
    %213 = vmatpush1.msra.mxu0 %v201
    %214 = vmatprep.subr.mxu0 0.0
    %215 = vmatpush1.msra.mxu0 %v202
    %216 = vmatprep.subr.mxu0 0.0
    %217 = vmatpush1.msra.mxu0 %v203
    %218 = vmatprep.subr.mxu0 0.0
    %219 = vmatpush1.msra.mxu0 %v204
    %220 = vmatprep.subr.mxu0 0.0
    %221 = vmatpush1.msra.mxu0 0.0
    %222 = vmatprep.subr.mxu0 0.0
    %223 = vmatpush1.msra.mxu0 0.0
    %224 = vmatprep.subr.mxu0 0.0
    %225 = vmatpush1.msra.mxu0 0.0
    %226 = vmatprep.subr.mxu0 0.0
    %227 = vmatpush1.msra.mxu0 0.0
    %228 = vmatprep.subr.mxu0 0.0
    %229 = vmatpush1.msra.mxu0 0.0
    %230 = vmatprep.subr.mxu0 0.0
    %231 = vmatpush1.msra.mxu0 0.0
    %232 = vmatprep.subr.mxu0 0.0
    %233 = vmatpush1.msra.mxu0 0.0
    %234 = vmatprep.subr.mxu0 0.0
    %235 = vmatpush1.msra.mxu0 0.0
    %236 = vmatprep.subr.mxu0 0.0
    %237 = vmatpush1.msra.mxu0 0.0
    %238 = vmatprep.subr.mxu0 0.0
    %239 = vmatpush1.msra.mxu0 0.0
    %240 = vmatprep.subr.mxu0 0.0
    %241 = vmatpush1.msra.mxu0 0.0
    %242 = vmatprep.subr.mxu0 0.0
    %243 = vmatpush1.msra.mxu0 0.0
    %244 = vmatprep.subr.mxu0 0.0
    %245 = vmatpush1.msra.mxu0 0.0
    %246 = vmatprep.subr.mxu0 0.0
    %247 = vmatpush1.msra.mxu0 0.0
    %248 = vmatprep.subr.mxu0 0.0
    %249 = vmatpush1.msra.mxu0 0.0
    %250 = vmatprep.subr.mxu0 0.0
    %251 = vmatpush1.msra.mxu0 0.0
    %252 = vmatprep.subr.mxu0 0.0
    %253 = vmatpush1.msra.mxu0 0.0
    %254 = vmatprep.subr.mxu0 0.0
    %255 = vmatpush1.msra.mxu0 0.0
    %256 = vmatprep.subr.mxu0 0.0
    %257 = vmatpush1.msra.mxu0 0.0
    %258 = vmatprep.subr.mxu0 0.0
    %259 = vmatpush1.msra.mxu0 0.0
    %260 = vmatprep.subr.mxu0 0.0
    %261 = vmatpush1.msra.mxu0 0.0
    %262 = vmatprep.subr.mxu0 0.0
    %263 = vmatpush1.msra.mxu0 0.0
    %264 = vmatprep.subr.mxu0 0.0
    %265 = vmatpush1.msra.mxu0 0.0
    %266 = vmatprep.subr.mxu0 0.0
    %267 = vmatpush1.msra.mxu0 0.0
    %268 = vmatprep.subr.mxu0 0.0
    %269 = vmatpush1.msra.mxu0 0.0
    %270 = vmatprep.subr.mxu0 0.0
    %271 = vmatpush1.msra.mxu0 0.0
    %272 = vmatprep.subr.mxu0 0.0
    %273 = vmatpush1.msra.mxu0 0.0
    %274 = vmatprep.subr.mxu0 0.0
    %275 = vmatpush1.msra.mxu0 0.0
    %276 = vmatprep.mubr.f32.mxu0 0.0
    %277 = vmatmul.mubr.f32.gmra.mrb[0].mxu0 %v210
    %v278 = vpop.f32.mrb[0].mxu0
    %v279 = vadd.f32 %v208, %v278
    %v280 = vpop.f32.mrb[0].mxu0
    %281 = vdwg.mxu0
    %v282 = vmax.f32 %v279, 0.0
    %v283 = vld [vmem:[%s3] sm:$0xff]
    %v284 = vld [vmem:[%s3 + $0x8] sm:$0xff]
    %v285 = vld [vmem:[%s3 + $0x10] sm:$0xff]
    %v286 = vld [vmem:[%s3 + $0x18] sm:$0xff]
    %v287 = vlaneseq
    %v288 = vshrl.u32 %v287, 7
    %v289 = vsub.s32 3, %v288
    %v290 = vrot.slane %v35, %v289
    %v292 = vsel %vm125, %v282, 0
    %294 = vmatprep.subr.mxu0 0.0
    %295 = vmatpush1.msra.mxu0 %v283
    %296 = vmatprep.subr.mxu0 0.0
    %297 = vmatpush1.msra.mxu0 %v284
    %298 = vmatprep.subr.mxu0 0.0
    %299 = vmatpush1.msra.mxu0 %v285
    %300 = vmatprep.subr.mxu0 0.0
    %301 = vmatpush1.msra.mxu0 %v286
    %302 = vmatprep.subr.mxu0 0.0
    %303 = vmatpush1.msra.mxu0 0.0
    %304 = vmatprep.subr.mxu0 0.0
    %305 = vmatpush1.msra.mxu0 0.0
    %306 = vmatprep.subr.mxu0 0.0
    %307 = vmatpush1.msra.mxu0 0.0
    %308 = vmatprep.subr.mxu0 0.0
    %309 = vmatpush1.msra.mxu0 0.0
    %310 = vmatprep.subr.mxu0 0.0
    %311 = vmatpush1.msra.mxu0 0.0
    %312 = vmatprep.subr.mxu0 0.0
    %313 = vmatpush1.msra.mxu0 0.0
    %314 = vmatprep.subr.mxu0 0.0
    %315 = vmatpush1.msra.mxu0 0.0
    %316 = vmatprep.subr.mxu0 0.0
    %317 = vmatpush1.msra.mxu0 0.0
    %318 = vmatprep.subr.mxu0 0.0
    %319 = vmatpush1.msra.mxu0 0.0
    %320 = vmatprep.subr.mxu0 0.0
    %321 = vmatpush1.msra.mxu0 0.0
    %322 = vmatprep.subr.mxu0 0.0
    %323 = vmatpush1.msra.mxu0 0.0
    %324 = vmatprep.subr.mxu0 0.0
    %325 = vmatpush1.msra.mxu0 0.0
    %326 = vmatprep.subr.mxu0 0.0
    %327 = vmatpush1.msra.mxu0 0.0
    %328 = vmatprep.subr.mxu0 0.0
    %329 = vmatpush1.msra.mxu0 0.0
    %330 = vmatprep.subr.mxu0 0.0
    %331 = vmatpush1.msra.mxu0 0.0
    %332 = vmatprep.subr.mxu0 0.0
    %333 = vmatpush1.msra.mxu0 0.0
    %334 = vmatprep.subr.mxu0 0.0
    %335 = vmatpush1.msra.mxu0 0.0
    %336 = vmatprep.subr.mxu0 0.0
    %337 = vmatpush1.msra.mxu0 0.0
    %338 = vmatprep.subr.mxu0 0.0
    %339 = vmatpush1.msra.mxu0 0.0
    %340 = vmatprep.subr.mxu0 0.0
    %341 = vmatpush1.msra.mxu0 0.0
    %342 = vmatprep.subr.mxu0 0.0
    %343 = vmatpush1.msra.mxu0 0.0
    %344 = vmatprep.subr.mxu0 0.0
    %345 = vmatpush1.msra.mxu0 0.0
    %346 = vmatprep.subr.mxu0 0.0
    %347 = vmatpush1.msra.mxu0 0.0
    %348 = vmatprep.subr.mxu0 0.0
    %349 = vmatpush1.msra.mxu0 0.0
    %350 = vmatprep.subr.mxu0 0.0
    %351 = vmatpush1.msra.mxu0 0.0
    %352 = vmatprep.subr.mxu0 0.0
    %353 = vmatpush1.msra.mxu0 0.0
    %354 = vmatprep.subr.mxu0 0.0
    %355 = vmatpush1.msra.mxu0 0.0
    %356 = vmatprep.subr.mxu0 0.0
    %357 = vmatpush1.msra.mxu0 0.0
    %358 = vmatprep.mubr.f32.mxu0 0.0
    %359 = vmatmul.mubr.f32.gmra.mrb[0].mxu0 %v292
    %v360 = vpop.f32.mrb[0].mxu0
    %v361 = vadd.f32 %v290, %v360
    %v362 = vpop.f32.mrb[0].mxu0
    %363 = vdwg.mxu0
    %vm364 = vcmask 7168
    %365 = vst.msk [vmem:[%s5] sm:$0xff] %vm364, %v361
    // Predicated region
    $region26: #{tpu_custom_call.1} parent=1 // pred_check
      _
    $region27: #{tpu_custom_call.1} parent=1 // pred_check_branch
      %367 = sbr.rel (0) target = $region29
    $region28: #{tpu_custom_call.1} parent=1 // pred_region
      _
    $region29: #{tpu_custom_call.1} parent=1 // pred_fallthru
      _
    // Predicated region
    $region30: #{tpu_custom_call.1} parent=1 // pred_check
      _
    $region31: #{tpu_custom_call.1} parent=1 // pred_check_branch
      %369 = sbr.rel (0) target = $region33
    $region32: #{tpu_custom_call.1} parent=1 // pred_region
      _
    $region33: #{tpu_custom_call.1} parent=1 // pred_fallthru
      _
    %370 = vsyncpa [#allocation3], 1

</llo_original>
